<compile_context>
chip_gen: v5e
topology: v5e:2x2
jax: 0.10.0
libtpu: 0.0.40
codegen_flags: <defaults>
</compile_context>

<pallas_src>
import jax
import jax.numpy as jnp
from jax.experimental import pallas as pl
from jax.experimental.pallas import tpu as pltpu


def _ffnn_kernel(x_ref, w1_ref, w2_ref, w3_ref, w4_ref, w5_ref, pack_ref, out_ref):
    """Fused fc1..fc5 (+folded BN, ReLU) for one batch tile.

    pack_ref (16, 128) f32 layout:
      rows 0..3 : BN scales for layers 1..4 (zero-padded along lanes)
      rows 4..7 : folded shifts ((bias - mean) * scale + beta) for layers 1..4
      row  8    : fc5 bias (first out_dim lanes)
    """
    pack = pack_ref[...]  # single small f32 load, sliced statically below

    def linear_bn_relu(h_bf16, w_ref, layer):
        d_out = w_ref.shape[1]
        y = jnp.dot(h_bf16, w_ref[...], preferred_element_type=jnp.float32)
        s = pack[layer:layer + 1, :d_out]          # (1, d_out) f32
        t = pack[4 + layer:5 + layer, :d_out]      # (1, d_out) f32
        return jnp.maximum(y * s + t, 0.0)         # BN(+bias) fold, ReLU in f32

    # In-kernel f32 -> bf16 cast of the streamed x tile (free VPU filler under
    # the MXU push cadence; saves a wrapper-side pass over x in HBM).
    h = linear_bn_relu(x_ref[...].astype(jnp.bfloat16), w1_ref, 0)  # fc1 -> bn1 -> relu
    h = linear_bn_relu(h.astype(jnp.bfloat16), w2_ref, 1)           # fc2 -> bn2 -> relu
    h = linear_bn_relu(h.astype(jnp.bfloat16), w3_ref, 2)           # fc3 -> bn3 -> relu
    h = linear_bn_relu(h.astype(jnp.bfloat16), w4_ref, 3)           # fc4 -> bn4 -> relu

    d5 = w5_ref.shape[1]
    y = jnp.dot(h.astype(jnp.bfloat16), w5_ref[...],
                preferred_element_type=jnp.float32)
    y = y + pack[8:9, :d5]                                          # fc5 (no activation)
    out_ref[...] = y.astype(out_ref.dtype)


def _fold_linear_bn(bias, gamma, beta, running_mean, running_var, eps):
    """Fold eval-mode BatchNorm1d AND the preceding Linear bias into scale/shift."""
    inv_std = 1.0 / jnp.sqrt(running_var + eps)
    scale = gamma * inv_std
    shift = (bias - running_mean) * scale + beta
    return scale, shift


def _round_up(n, m):
    return ((n + m - 1) // m) * m


def prepare_params(params, *, eps=1e-5):
    """One-time (load-time) prep: cast weights to bf16, fold BN+bias into a pack.

    Hoisted out of the per-call path so repeated inference calls don't re-run
    the casts / ~10 scatter-style pack updates.
    """
    (w1, b1, bn1), (w2, b2, bn2), (w3, b3, bn3), (w4, b4, bn4), (w5, b5) = params

    for w in (w1, w2, w3, w4, w5):
        assert w.shape[1] <= 128, (
            "pack layout assumes every hidden/output dim <= 128; got %s" % (w.shape,))

    pack = jnp.zeros((16, 128), dtype=jnp.float32)
    for l, (b, bn) in enumerate(((b1, bn1), (b2, bn2), (b3, bn3), (b4, bn4))):
        s, t = _fold_linear_bn(b, *bn, eps)
        pack = pack.at[l, : s.shape[0]].set(s.astype(jnp.float32))
        pack = pack.at[4 + l, : t.shape[0]].set(t.astype(jnp.float32))
    pack = pack.at[8, : b5.shape[0]].set(b5.astype(jnp.float32))

    weights = tuple(w.astype(jnp.bfloat16) for w in (w1, w2, w3, w4, w5))
    return weights, pack


def feedforward_nn_forward(x, prepared, *, block_b=2048):
    """x: (B, input_dim) float32.  prepared = prepare_params(params).
    Returns (B, 8) float32."""
    weights, pack = prepared
    B, in_dim = x.shape
    out_dim = weights[4].shape[1]
    assert weights[0].shape[0] == in_dim

    # Batch tiling: TB multiple of 128; cap so the grid has >=2 steps whenever
    # B > 128 (lets dimension_semantics=("parallel",) use both v7x TCs).
    two_step_cap = _round_up(max(1, -(-B // 2)), 128)
    tb = max(128, min(_round_up(block_b, 128), two_step_cap))
    b_pad = _round_up(B, tb)
    if b_pad != B:
        x = jnp.pad(x, ((0, b_pad - B), (0, 0)))

    resident = lambda shape: pl.BlockSpec(shape, lambda i: (0, 0))

    flops = 2 * b_pad * sum(int(w.shape[0]) * int(w.shape[1]) for w in weights)
    bytes_accessed = (
        b_pad * in_dim * 4                                   # x read (f32)
        + b_pad * out_dim * 4                                # out write (f32)
        + sum(int(w.size) for w in weights) * 2              # bf16 weights
        + int(pack.size) * 4)                                # pack

    out = pl.pallas_call(
        _ffnn_kernel,
        out_shape=jax.ShapeDtypeStruct((b_pad, out_dim), jnp.float32),
        grid=(b_pad // tb,),
        in_specs=[
            pl.BlockSpec((tb, in_dim), lambda i: (i, 0)),    # x streamed per batch tile (f32)
            resident(weights[0].shape),                      # weights + pack resident
            resident(weights[1].shape),
            resident(weights[2].shape),
            resident(weights[3].shape),
            resident(weights[4].shape),
            resident(pack.shape),
        ],
        out_specs=pl.BlockSpec((tb, out_dim), lambda i: (i, 0)),
        compiler_params=pltpu.CompilerParams(
            dimension_semantics=("parallel",),
            vmem_limit_bytes=32 * 1024 * 1024,   # v5e default is 16 MiB; 32 MiB is safe on all gens
        ),
        cost_estimate=pl.CostEstimate(
            flops=flops, transcendentals=0, bytes_accessed=bytes_accessed),
    )(x, *weights, pack)

    return out[:B]


def init_params(key, input_dim, hidden_dim=128):
    """Deterministic parameter init matching the module's shapes (non-trivial BN stats)."""
    dims = [(input_dim, hidden_dim), (hidden_dim, 64), (64, 32), (32, 16), (16, 8)]
    keys = jax.random.split(key, 6 * len(dims))
    params = []
    for i, (d_in, d_out) in enumerate(dims):
        kw, kb, kg, kbe, km, kv = keys[6 * i: 6 * i + 6]
        w = jax.random.normal(kw, (d_in, d_out), jnp.float32) / jnp.sqrt(d_in)
        b = 0.1 * jax.random.normal(kb, (d_out,), jnp.float32)
        if i < 4:  # layers followed by BatchNorm1d
            gamma = 1.0 + 0.2 * jax.random.normal(kg, (d_out,), jnp.float32)
            beta = 0.1 * jax.random.normal(kbe, (d_out,), jnp.float32)
            running_mean = 0.1 * jax.random.normal(km, (d_out,), jnp.float32)
            running_var = 0.5 + jax.random.uniform(kv, (d_out,), jnp.float32)
            params.append((w, b, (gamma, beta, running_mean, running_var)))
        else:
            params.append((w, b))
    return tuple(params)


def reference_forward(x, params, *, eps=1e-5):
    """Pure-JAX reference mirroring the kernel's precision choices
    (bf16 inputs/weights/activations into each dot, f32 accumulation & BN/ReLU)."""
    (w1, b1, bn1), (w2, b2, bn2), (w3, b3, bn3), (w4, b4, bn4), (w5, b5) = params

    def layer(h, w, b, bn):
        s, t = _fold_linear_bn(b, *bn, eps)
        y = jnp.dot(h.astype(jnp.bfloat16), w.astype(jnp.bfloat16),
                    preferred_element_type=jnp.float32)
        return jnp.maximum(y * s[None, :] + t[None, :], 0.0)

    h = layer(x, w1, b1, bn1)
    h = layer(h, w2, b2, bn2)
    h = layer(h, w3, b3, bn3)
    h = layer(h, w4, b4, bn4)
    return jnp.dot(h.astype(jnp.bfloat16), w5.astype(jnp.bfloat16),
                   preferred_element_type=jnp.float32) + b5[None, :]


if __name__ == "__main__":
    key = jax.random.PRNGKey(0)
    k_param, k_x = jax.random.split(key)

    batch = 300        # small, but exercises multiple grid steps + a padded last tile
    input_dim = 30     # pca_30 -> 30 principal components

    params = init_params(k_param, input_dim)
    prepared = prepare_params(params)          # one-time: bf16 weights + BN/bias pack
    x = jax.random.normal(k_x, (batch, input_dim), dtype=jnp.float32)

    ref = reference_forward(x, params)

    # Small-tile path (TB=128 -> grid of 3, last tile padded).
    out_small_tb = feedforward_nn_forward(x, prepared, block_b=128)
    out_small_tb = jax.block_until_ready(out_small_tb)

    # Default-tile path (TB capped at round_up(ceil(B/2),128)=256 -> 2 grid steps,
    # so both v7x TensorCores get work).
    out_default = feedforward_nn_forward(x, prepared)
    out_default = jax.block_until_ready(out_default)

    assert out_small_tb.shape == (batch, 8), out_small_tb.shape
    assert out_default.shape == (batch, 8), out_default.shape
    assert jnp.allclose(out_small_tb, ref, atol=5e-3, rtol=5e-3), (
        float(jnp.max(jnp.abs(out_small_tb - ref))))
    assert jnp.allclose(out_default, ref, atol=5e-3, rtol=5e-3), (
        float(jnp.max(jnp.abs(out_default - ref))))

    print("KERNEL_OK")
</pallas_src>

<mosaic_0001>
module attributes {stable_mosaic.version = 11 : i64} {
  func.func @_ffnn_kernel(%arg0: i32, %arg1: memref<128x30xf32, #tpu.memory_space<vmem>>, %arg2: memref<30x128xbf16, #tpu.memory_space<vmem>>, %arg3: memref<128x64xbf16, #tpu.memory_space<vmem>>, %arg4: memref<64x32xbf16, #tpu.memory_space<vmem>>, %arg5: memref<32x16xbf16, #tpu.memory_space<vmem>>, %arg6: memref<16x8xbf16, #tpu.memory_space<vmem>>, %arg7: memref<16x128xf32, #tpu.memory_space<vmem>>, %arg8: memref<128x8xf32, #tpu.memory_space<vmem>>) attributes {dimension_semantics = [#tpu.dimension_semantics<parallel>], iteration_bounds = array<i64: 3>, scalar_prefetch = 0 : i64, scratch_operands = 0 : i64, tpu.core_type = #tpu.core_type<tc>, window_params = [{transform_indices = @transform_0, window_bounds = array<i64: 128, 30>}, {pipeline_mode = #tpu.pipeline_mode<synchronous>, transform_indices = @transform_1, window_bounds = array<i64: 30, 128>}, {pipeline_mode = #tpu.pipeline_mode<synchronous>, transform_indices = @transform_2, window_bounds = array<i64: 128, 64>}, {pipeline_mode = #tpu.pipeline_mode<synchronous>, transform_indices = @transform_3, window_bounds = array<i64: 64, 32>}, {pipeline_mode = #tpu.pipeline_mode<synchronous>, transform_indices = @transform_4, window_bounds = array<i64: 32, 16>}, {pipeline_mode = #tpu.pipeline_mode<synchronous>, transform_indices = @transform_5, window_bounds = array<i64: 16, 8>}, {pipeline_mode = #tpu.pipeline_mode<synchronous>, transform_indices = @transform_6, window_bounds = array<i64: 16, 128>}, {transform_indices = @transform_7, window_bounds = array<i64: 128, 8>}]} {
    %c0 = arith.constant 0 : index
    %c0_0 = arith.constant 0 : index
    %0 = vector.load %arg7[%c0, %c0_0] : memref<16x128xf32, #tpu.memory_space<vmem>>, vector<16x128xf32>
    %c0_1 = arith.constant 0 : index
    %c0_2 = arith.constant 0 : index
    %1 = vector.load %arg1[%c0_1, %c0_2] : memref<128x30xf32, #tpu.memory_space<vmem>>, vector<128x30xf32>
    %2 = arith.truncf %1 : vector<128x30xf32> to vector<128x30xbf16>
    %c0_3 = arith.constant 0 : index
    %c0_4 = arith.constant 0 : index
    %3 = vector.load %arg2[%c0_3, %c0_4] : memref<30x128xbf16, #tpu.memory_space<vmem>>, vector<30x128xbf16>
    %cst = arith.constant dense<0.000000e+00> : vector<128x128xf32>
    %4 = tpu.matmul %2, %3, %cst {dimension_numbers = #tpu.dot_dimension_numbers<[1], [0], [0], [1], [0, 0, 1, 1], [], []>} : vector<128x30xbf16>, vector<30x128xbf16>, vector<128x128xf32> -> vector<128x128xf32>
    %5 = vector.extract_strided_slice %0 {offsets = [0, 0], sizes = [1, 128], strides = [1, 1]} : vector<16x128xf32> to vector<1x128xf32>
    %6 = vector.extract_strided_slice %0 {offsets = [4, 0], sizes = [1, 128], strides = [1, 1]} : vector<16x128xf32> to vector<1x128xf32>
    %7 = vector.broadcast %5 : vector<1x128xf32> to vector<128x128xf32>
    %8 = arith.mulf %4, %7 : vector<128x128xf32>
    %9 = vector.broadcast %6 : vector<1x128xf32> to vector<128x128xf32>
    %10 = arith.addf %8, %9 : vector<128x128xf32>
    %cst_5 = arith.constant 0.000000e+00 : f32
    %11 = vector.broadcast %cst_5 : f32 to vector<128x128xf32>
    %12 = arith.maximumf %10, %11 : vector<128x128xf32>
    %13 = arith.truncf %12 : vector<128x128xf32> to vector<128x128xbf16>
    %c0_6 = arith.constant 0 : index
    %c0_7 = arith.constant 0 : index
    %14 = vector.load %arg3[%c0_6, %c0_7] : memref<128x64xbf16, #tpu.memory_space<vmem>>, vector<128x64xbf16>
    %cst_8 = arith.constant dense<0.000000e+00> : vector<128x64xf32>
    %15 = tpu.matmul %13, %14, %cst_8 {dimension_numbers = #tpu.dot_dimension_numbers<[1], [0], [0], [1], [0, 0, 1, 1], [], []>} : vector<128x128xbf16>, vector<128x64xbf16>, vector<128x64xf32> -> vector<128x64xf32>
    %16 = vector.extract_strided_slice %0 {offsets = [1, 0], sizes = [1, 64], strides = [1, 1]} : vector<16x128xf32> to vector<1x64xf32>
    %17 = vector.extract_strided_slice %0 {offsets = [5, 0], sizes = [1, 64], strides = [1, 1]} : vector<16x128xf32> to vector<1x64xf32>
    %18 = vector.broadcast %16 : vector<1x64xf32> to vector<128x64xf32>
    %19 = arith.mulf %15, %18 : vector<128x64xf32>
    %20 = vector.broadcast %17 : vector<1x64xf32> to vector<128x64xf32>
    %21 = arith.addf %19, %20 : vector<128x64xf32>
    %cst_9 = arith.constant 0.000000e+00 : f32
    %22 = vector.broadcast %cst_9 : f32 to vector<128x64xf32>
    %23 = arith.maximumf %21, %22 : vector<128x64xf32>
    %24 = arith.truncf %23 : vector<128x64xf32> to vector<128x64xbf16>
    %c0_10 = arith.constant 0 : index
    %c0_11 = arith.constant 0 : index
    %25 = vector.load %arg4[%c0_10, %c0_11] : memref<64x32xbf16, #tpu.memory_space<vmem>>, vector<64x32xbf16>
    %cst_12 = arith.constant dense<0.000000e+00> : vector<128x32xf32>
    %26 = tpu.matmul %24, %25, %cst_12 {dimension_numbers = #tpu.dot_dimension_numbers<[1], [0], [0], [1], [0, 0, 1, 1], [], []>} : vector<128x64xbf16>, vector<64x32xbf16>, vector<128x32xf32> -> vector<128x32xf32>
    %27 = vector.extract_strided_slice %0 {offsets = [2, 0], sizes = [1, 32], strides = [1, 1]} : vector<16x128xf32> to vector<1x32xf32>
    %28 = vector.extract_strided_slice %0 {offsets = [6, 0], sizes = [1, 32], strides = [1, 1]} : vector<16x128xf32> to vector<1x32xf32>
    %29 = vector.broadcast %27 : vector<1x32xf32> to vector<128x32xf32>
    %30 = arith.mulf %26, %29 : vector<128x32xf32>
    %31 = vector.broadcast %28 : vector<1x32xf32> to vector<128x32xf32>
    %32 = arith.addf %30, %31 : vector<128x32xf32>
    %cst_13 = arith.constant 0.000000e+00 : f32
    %33 = vector.broadcast %cst_13 : f32 to vector<128x32xf32>
    %34 = arith.maximumf %32, %33 : vector<128x32xf32>
    %35 = arith.truncf %34 : vector<128x32xf32> to vector<128x32xbf16>
    %c0_14 = arith.constant 0 : index
    %c0_15 = arith.constant 0 : index
    %36 = vector.load %arg5[%c0_14, %c0_15] : memref<32x16xbf16, #tpu.memory_space<vmem>>, vector<32x16xbf16>
    %cst_16 = arith.constant dense<0.000000e+00> : vector<128x16xf32>
    %37 = tpu.matmul %35, %36, %cst_16 {dimension_numbers = #tpu.dot_dimension_numbers<[1], [0], [0], [1], [0, 0, 1, 1], [], []>} : vector<128x32xbf16>, vector<32x16xbf16>, vector<128x16xf32> -> vector<128x16xf32>
    %38 = vector.extract_strided_slice %0 {offsets = [3, 0], sizes = [1, 16], strides = [1, 1]} : vector<16x128xf32> to vector<1x16xf32>
    %39 = vector.extract_strided_slice %0 {offsets = [7, 0], sizes = [1, 16], strides = [1, 1]} : vector<16x128xf32> to vector<1x16xf32>
    %40 = vector.broadcast %38 : vector<1x16xf32> to vector<128x16xf32>
    %41 = arith.mulf %37, %40 : vector<128x16xf32>
    %42 = vector.broadcast %39 : vector<1x16xf32> to vector<128x16xf32>
    %43 = arith.addf %41, %42 : vector<128x16xf32>
    %cst_17 = arith.constant 0.000000e+00 : f32
    %44 = vector.broadcast %cst_17 : f32 to vector<128x16xf32>
    %45 = arith.maximumf %43, %44 : vector<128x16xf32>
    %46 = arith.truncf %45 : vector<128x16xf32> to vector<128x16xbf16>
    %c0_18 = arith.constant 0 : index
    %c0_19 = arith.constant 0 : index
    %47 = vector.load %arg6[%c0_18, %c0_19] : memref<16x8xbf16, #tpu.memory_space<vmem>>, vector<16x8xbf16>
    %cst_20 = arith.constant dense<0.000000e+00> : vector<128x8xf32>
    %48 = tpu.matmul %46, %47, %cst_20 {dimension_numbers = #tpu.dot_dimension_numbers<[1], [0], [0], [1], [0, 0, 1, 1], [], []>} : vector<128x16xbf16>, vector<16x8xbf16>, vector<128x8xf32> -> vector<128x8xf32>
    %49 = vector.extract_strided_slice %0 {offsets = [8, 0], sizes = [1, 8], strides = [1, 1]} : vector<16x128xf32> to vector<1x8xf32>
    %50 = vector.broadcast %49 : vector<1x8xf32> to vector<128x8xf32>
    %51 = arith.addf %48, %50 : vector<128x8xf32>
    %c0_21 = arith.constant 0 : index
    %c0_22 = arith.constant 0 : index
    %52 = vector.load %arg8[%c0_21, %c0_22] : memref<128x8xf32, #tpu.memory_space<vmem>>, vector<128x8xf32>
    tpu.vector_store %arg8[%c0_21, %c0_22], %51 {strides = array<i32>} : memref<128x8xf32, #tpu.memory_space<vmem>>, vector<128x8xf32>,
    return
  }
  func.func @transform_0(%arg0: i32) -> (i32, i32) {
    %c0_i32 = arith.constant 0 : i32
    %c0_i32_0 = arith.constant 0 : i32
    return %arg0, %c0_i32 : i32, i32
  }
  func.func @transform_1(%arg0: i32) -> (i32, i32) {
    %c0_i32 = arith.constant 0 : i32
    %c0_i32_0 = arith.constant 0 : i32
    %c0_i32_1 = arith.constant 0 : i32
    return %c0_i32, %c0_i32_0 : i32, i32
  }
  func.func @transform_2(%arg0: i32) -> (i32, i32) {
    %c0_i32 = arith.constant 0 : i32
    %c0_i32_0 = arith.constant 0 : i32
    %c0_i32_1 = arith.constant 0 : i32
    return %c0_i32, %c0_i32_0 : i32, i32
  }
  func.func @transform_3(%arg0: i32) -> (i32, i32) {
    %c0_i32 = arith.constant 0 : i32
    %c0_i32_0 = arith.constant 0 : i32
    %c0_i32_1 = arith.constant 0 : i32
    return %c0_i32, %c0_i32_0 : i32, i32
  }
  func.func @transform_4(%arg0: i32) -> (i32, i32) {
    %c0_i32 = arith.constant 0 : i32
    %c0_i32_0 = arith.constant 0 : i32
    %c0_i32_1 = arith.constant 0 : i32
    return %c0_i32, %c0_i32_0 : i32, i32
  }
  func.func @transform_5(%arg0: i32) -> (i32, i32) {
    %c0_i32 = arith.constant 0 : i32
    %c0_i32_0 = arith.constant 0 : i32
    %c0_i32_1 = arith.constant 0 : i32
    return %c0_i32, %c0_i32_0 : i32, i32
  }
  func.func @transform_6(%arg0: i32) -> (i32, i32) {
    %c0_i32 = arith.constant 0 : i32
    %c0_i32_0 = arith.constant 0 : i32
    %c0_i32_1 = arith.constant 0 : i32
    return %c0_i32, %c0_i32_0 : i32, i32
  }
  func.func @transform_7(%arg0: i32) -> (i32, i32) {
    %c0_i32 = arith.constant 0 : i32
    %c0_i32_0 = arith.constant 0 : i32
    return %arg0, %c0_i32 : i32, i32
  }
}

</mosaic_0001>

<llo_original>
// kernel: tpu_custom_call.1
$region0: #{tpu_custom_call.1}
  #allocation0 [shape = 'u32[]', space=smem, size = 0x4, offset = 0x4, fixed_abs, tag = 'smem constant byte address 0x4 - core index']
  #allocation1 [shape = 'u32[72,128]{1,0:T(1,128)}', space=vmem, size = 0x9000, scoped, tag = 'internal scratch']
  %s0 = inlined_call_operand.vmem [shape: f32[384,30], index: 0, kind: input, shape index: {}]
  %s1 = inlined_call_operand.vmem [shape: bf16[30,128], index: 1, kind: input, shape index: {}]
  %s2 = inlined_call_operand.vmem [shape: bf16[128,64], index: 2, kind: input, shape index: {}]
  %s3 = inlined_call_operand.vmem [shape: bf16[64,32], index: 3, kind: input, shape index: {}]
  %s4 = inlined_call_operand.vmem [shape: bf16[32,16], index: 4, kind: input, shape index: {}]
  %s5 = inlined_call_operand.vmem [shape: bf16[16,8], index: 5, kind: input, shape index: {}]
  %s6 = inlined_call_operand.vmem [shape: f32[16,128], index: 6, kind: input, shape index: {}]
  %s7 = inlined_call_operand.vmem [shape: f32[384,8], index: 7, kind: output, shape index: {}]
  %s8 = sld [smem:[#allocation0]]
  $region61: #{tpu_custom_call.1} parent=0
    _
  %s10 = ssub.s32 1, %s8
  %s11 = scalar_select 0, %s10, %s8
  loop: start=0, step=1, limit=5
  $region2: #{tpu_custom_call.1} parent=0 // loop_pre_header
    _
  $region3: #{tpu_custom_call.1} parent=0 // loop_header
    %s13 = sphi 0, %s17
    %p14 = scmp.ge.s32.totalorder %s13, 5
    %s23 = sphi 0, %s25
    %s26 = sphi 0, %s23
    %s27 = sphi 0, %s26
    %s43 = sphi 0, %s27
    %s47 = sphi 0, %s47
    %s49 = sphi 0, %s47
    %s50 = sphi 0, %s49
    %s64 = sphi 0, %s50
    %s68 = sphi 0, %s68
    %s70 = sphi 0, %s68
    %s71 = sphi 0, %s70
    %s85 = sphi 0, %s71
    %s89 = sphi 0, %s89
    %s91 = sphi 0, %s89
    %s92 = sphi 0, %s91
    %s106 = sphi 0, %s92
    %s110 = sphi 0, %s110
    %s112 = sphi 0, %s110
    %s113 = sphi 0, %s112
    %s127 = sphi 0, %s113
    %s131 = sphi 0, %s131
    %s133 = sphi 0, %s131
    %s134 = sphi 0, %s133
    %s148 = sphi 0, %s134
    %s152 = sphi 0, %s152
    %s154 = sphi 0, %s152
    %s155 = sphi 0, %s154
    %s169 = sphi 0, %s155
    %s175 = sphi 0, %s177
    %s178 = sphi 0, %s175
    %s179 = sphi 0, %s178
    %s195 = sphi 0, %s179
  $region4: #{tpu_custom_call.1} parent=0 // loop_header_branch
    %16 = sbr.rel (%p14) target = $region8
  $region5: #{tpu_custom_call.1} parent=0 // loop_body
    %s18 = ssub.s32 %s13, 1
    %s19 = ssub.s32 %s13, 2
    %s20 = sadd.s32 %s13, 1
    %s21 = ssub.s32 %s13, %s20
    %p22 = scmp.eq.s32.totalorder %s21, 0
    %s24 = sadd.s32 %s23, 1
    %s25 = scalar_select %p22, %s23, %s24
    %p28 = pneg %p22
    %p29 = scmp.eq.s32.totalorder %s13, 2
    %p30 = por %p28, %p29
    %p31 = scmp.ne.s32.totalorder %s23, %s26
    %p32 = scmp.eq.s32.totalorder %s13, 0
    %p33 = por %p31, %p32
    %p34 = scmp.ne.s32.totalorder %s23, %s26
    %p35 = scmp.eq.s32.totalorder %s18, 2
    %p36 = por %p34, %p35
    %p37 = scmp.ne.s32.totalorder %s26, %s27
    %p38 = scmp.eq.s32.totalorder %s18, 0
    %p39 = por %p37, %p38
    %p40 = scmp.ne.s32.totalorder %s26, %s27
    %p41 = scmp.eq.s32.totalorder %s19, 2
    %p42 = por %p40, %p41
    %p44 = scmp.ne.s32.totalorder %s27, %s43
    %p45 = scmp.eq.s32.totalorder %s19, 0
    %p46 = por %p44, %p45
    %s48 = sadd.s32 %s47, 1
    %p51 = scmp.eq.s32.totalorder %s13, 2
    %p52 = scmp.ne.s32.totalorder %s47, %s49
    %p53 = scmp.eq.s32.totalorder %s13, 0
    %p54 = por %p52, %p53
    %p55 = scmp.ne.s32.totalorder %s47, %s49
    %p56 = scmp.eq.s32.totalorder %s18, 2
    %p57 = por %p55, %p56
    %p58 = scmp.ne.s32.totalorder %s49, %s50
    %p59 = scmp.eq.s32.totalorder %s18, 0
    %p60 = por %p58, %p59
    %p61 = scmp.ne.s32.totalorder %s49, %s50
    %p62 = scmp.eq.s32.totalorder %s19, 2
    %p63 = por %p61, %p62
    %p65 = scmp.ne.s32.totalorder %s50, %s64
    %p66 = scmp.eq.s32.totalorder %s19, 0
    %p67 = por %p65, %p66
    %s69 = sadd.s32 %s68, 1
    %p72 = scmp.eq.s32.totalorder %s13, 2
    %p73 = scmp.ne.s32.totalorder %s68, %s70
    %p74 = scmp.eq.s32.totalorder %s13, 0
    %p75 = por %p73, %p74
    %p76 = scmp.ne.s32.totalorder %s68, %s70
    %p77 = scmp.eq.s32.totalorder %s18, 2
    %p78 = por %p76, %p77
    %p79 = scmp.ne.s32.totalorder %s70, %s71
    %p80 = scmp.eq.s32.totalorder %s18, 0
    %p81 = por %p79, %p80
    %p82 = scmp.ne.s32.totalorder %s70, %s71
    %p83 = scmp.eq.s32.totalorder %s19, 2
    %p84 = por %p82, %p83
    %p86 = scmp.ne.s32.totalorder %s71, %s85
    %p87 = scmp.eq.s32.totalorder %s19, 0
    %p88 = por %p86, %p87
    %s90 = sadd.s32 %s89, 1
    %p93 = scmp.eq.s32.totalorder %s13, 2
    %p94 = scmp.ne.s32.totalorder %s89, %s91
    %p95 = scmp.eq.s32.totalorder %s13, 0
    %p96 = por %p94, %p95
    %p97 = scmp.ne.s32.totalorder %s89, %s91
    %p98 = scmp.eq.s32.totalorder %s18, 2
    %p99 = por %p97, %p98
    %p100 = scmp.ne.s32.totalorder %s91, %s92
    %p101 = scmp.eq.s32.totalorder %s18, 0
    %p102 = por %p100, %p101
    %p103 = scmp.ne.s32.totalorder %s91, %s92
    %p104 = scmp.eq.s32.totalorder %s19, 2
    %p105 = por %p103, %p104
    %p107 = scmp.ne.s32.totalorder %s92, %s106
    %p108 = scmp.eq.s32.totalorder %s19, 0
    %p109 = por %p107, %p108
    %s111 = sadd.s32 %s110, 1
    %p114 = scmp.eq.s32.totalorder %s13, 2
    %p115 = scmp.ne.s32.totalorder %s110, %s112
    %p116 = scmp.eq.s32.totalorder %s13, 0
    %p117 = por %p115, %p116
    %p118 = scmp.ne.s32.totalorder %s110, %s112
    %p119 = scmp.eq.s32.totalorder %s18, 2
    %p120 = por %p118, %p119
    %p121 = scmp.ne.s32.totalorder %s112, %s113
    %p122 = scmp.eq.s32.totalorder %s18, 0
    %p123 = por %p121, %p122
    %p124 = scmp.ne.s32.totalorder %s112, %s113
    %p125 = scmp.eq.s32.totalorder %s19, 2
    %p126 = por %p124, %p125
    %p128 = scmp.ne.s32.totalorder %s113, %s127
    %p129 = scmp.eq.s32.totalorder %s19, 0
    %p130 = por %p128, %p129
    %s132 = sadd.s32 %s131, 1
    %p135 = scmp.eq.s32.totalorder %s13, 2
    %p136 = scmp.ne.s32.totalorder %s131, %s133
    %p137 = scmp.eq.s32.totalorder %s13, 0
    %p138 = por %p136, %p137
    %p139 = scmp.ne.s32.totalorder %s131, %s133
    %p140 = scmp.eq.s32.totalorder %s18, 2
    %p141 = por %p139, %p140
    %p142 = scmp.ne.s32.totalorder %s133, %s134
    %p143 = scmp.eq.s32.totalorder %s18, 0
    %p144 = por %p142, %p143
    %p145 = scmp.ne.s32.totalorder %s133, %s134
    %p146 = scmp.eq.s32.totalorder %s19, 2
    %p147 = por %p145, %p146
    %p149 = scmp.ne.s32.totalorder %s134, %s148
    %p150 = scmp.eq.s32.totalorder %s19, 0
    %p151 = por %p149, %p150
    %s153 = sadd.s32 %s152, 1
    %p156 = scmp.eq.s32.totalorder %s13, 2
    %p157 = scmp.ne.s32.totalorder %s152, %s154
    %p158 = scmp.eq.s32.totalorder %s13, 0
    %p159 = por %p157, %p158
    %p160 = scmp.ne.s32.totalorder %s152, %s154
    %p161 = scmp.eq.s32.totalorder %s18, 2
    %p162 = por %p160, %p161
    %p163 = scmp.ne.s32.totalorder %s154, %s155
    %p164 = scmp.eq.s32.totalorder %s18, 0
    %p165 = por %p163, %p164
    %p166 = scmp.ne.s32.totalorder %s154, %s155
    %p167 = scmp.eq.s32.totalorder %s19, 2
    %p168 = por %p166, %p167
    %p170 = scmp.ne.s32.totalorder %s155, %s169
    %p171 = scmp.eq.s32.totalorder %s19, 0
    %p172 = por %p170, %p171
    %s173 = ssub.s32 %s13, %s20
    %p174 = scmp.eq.s32.totalorder %s173, 0
    %s176 = sadd.s32 %s175, 1
    %s177 = scalar_select %p174, %s175, %s176
    %p180 = pneg %p174
    %p181 = scmp.eq.s32.totalorder %s13, 2
    %p182 = por %p180, %p181
    %p183 = scmp.ne.s32.totalorder %s175, %s178
    %p184 = scmp.eq.s32.totalorder %s13, 0
    %p185 = por %p183, %p184
    %p186 = scmp.ne.s32.totalorder %s175, %s178
    %p187 = scmp.eq.s32.totalorder %s18, 2
    %p188 = por %p186, %p187
    %p189 = scmp.ne.s32.totalorder %s178, %s179
    %p190 = scmp.eq.s32.totalorder %s18, 0
    %p191 = por %p189, %p190
    %p192 = scmp.ne.s32.totalorder %s178, %s179
    %p193 = scmp.eq.s32.totalorder %s19, 2
    %p194 = por %p192, %p193
    %p196 = scmp.ne.s32.totalorder %s179, %s195
    %p197 = scmp.eq.s32.totalorder %s19, 0
    %p198 = por %p196, %p197
    %p199 = scmp.le.s32.totalorder 1, %s13
    %p200 = scmp.lt.s32.totalorder %s13, 4
    %p201 = pnand %p199, %p200
    %p202 = pneg %p201
    // Predicated region
    $region9: #{tpu_custom_call.1} parent=5 // pred_check
      _
    $region10: #{tpu_custom_call.1} parent=5 // pred_check_branch
      %204 = sbr.rel (%p201) target = $region12
    $region11: #{tpu_custom_call.1} parent=5 // pred_region
      %s205 = ssub.s32 %s13, 1
      // Predicated region
      $region13: #{tpu_custom_call.1} parent=11 // pred_check
        %p206 = pneg %p60
      $region14: #{tpu_custom_call.1} parent=11 // pred_check_branch
        %208 = sbr.rel (%p206) target = $region16
      $region15: #{tpu_custom_call.1} parent=11 // pred_region
        _
      $region16: #{tpu_custom_call.1} parent=11 // pred_fallthru
        _
      // Predicated region
      $region17: #{tpu_custom_call.1} parent=11 // pred_check
        %p209 = pneg %p81
      $region18: #{tpu_custom_call.1} parent=11 // pred_check_branch
        %211 = sbr.rel (%p209) target = $region20
      $region19: #{tpu_custom_call.1} parent=11 // pred_region
        _
      $region20: #{tpu_custom_call.1} parent=11 // pred_fallthru
        _
      // Predicated region
      $region21: #{tpu_custom_call.1} parent=11 // pred_check
        %p212 = pneg %p102
      $region22: #{tpu_custom_call.1} parent=11 // pred_check_branch
        %214 = sbr.rel (%p212) target = $region24
      $region23: #{tpu_custom_call.1} parent=11 // pred_region
        _
      $region24: #{tpu_custom_call.1} parent=11 // pred_fallthru
        _
      // Predicated region
      $region25: #{tpu_custom_call.1} parent=11 // pred_check
        %p215 = pneg %p123
      $region26: #{tpu_custom_call.1} parent=11 // pred_check_branch
        %217 = sbr.rel (%p215) target = $region28
      $region27: #{tpu_custom_call.1} parent=11 // pred_region
        _
      $region28: #{tpu_custom_call.1} parent=11 // pred_fallthru
        _
      // Predicated region
      $region29: #{tpu_custom_call.1} parent=11 // pred_check
        %p218 = pneg %p144
      $region30: #{tpu_custom_call.1} parent=11 // pred_check_branch
        %220 = sbr.rel (%p218) target = $region32
      $region31: #{tpu_custom_call.1} parent=11 // pred_region
        _
      $region32: #{tpu_custom_call.1} parent=11 // pred_fallthru
        _
      // Predicated region
      $region33: #{tpu_custom_call.1} parent=11 // pred_check
        %p221 = pneg %p165
      $region34: #{tpu_custom_call.1} parent=11 // pred_check_branch
        %223 = sbr.rel (%p221) target = $region36
      $region35: #{tpu_custom_call.1} parent=11 // pred_region
        _
      $region36: #{tpu_custom_call.1} parent=11 // pred_fallthru
        _
    $region12: #{tpu_custom_call.1} parent=5 // pred_fallthru
      _
    %p224 = scmp.lt.s32.totalorder %s13, 3
    // Predicated region
    $region37: #{tpu_custom_call.1} parent=5 // pred_check
      %p225 = pneg %p224
    $region38: #{tpu_custom_call.1} parent=5 // pred_check_branch
      %227 = sbr.rel (%p225) target = $region40
    $region39: #{tpu_custom_call.1} parent=5 // pred_region
      // Predicated region
      $region41: #{tpu_custom_call.1} parent=39 // pred_check
        %p228 = pneg %p33
      $region42: #{tpu_custom_call.1} parent=39 // pred_check_branch
        %230 = sbr.rel (%p228) target = $region44
      $region43: #{tpu_custom_call.1} parent=39 // pred_region
        %s231 = smul.u32 16, %s13
        %p232 = scmp.lt.s32.totalorder %s231, 47
        %s233 = scalar_select %p232, %s231, 47
        %s234 = smul.addr %s233, 8
        %s235 = scalar_lea.vmem %s0, %s234
        %s236 = smul.u32 16, %s13
      $region44: #{tpu_custom_call.1} parent=39 // pred_fallthru
        _
    $region40: #{tpu_custom_call.1} parent=5 // pred_fallthru
      _
    %p237 = scmp.le.s32.totalorder 1, %s13
    %p238 = scmp.lt.s32.totalorder %s13, 4
    %p239 = pnand %p237, %p238
    %p240 = pneg %p239
    // Predicated region
    $region45: #{tpu_custom_call.1} parent=5 // pred_check
      _
    $region46: #{tpu_custom_call.1} parent=5 // pred_check_branch
      %242 = sbr.rel (%p239) target = $region48
    $region47: #{tpu_custom_call.1} parent=5 // pred_region
      %s243 = ssub.s32 %s13, 1
      %s244 = smul.u32 16, %s18
      %p245 = scmp.lt.s32.totalorder %s244, 47
      %s246 = scalar_select %p245, %s244, 47
      %s247 = smul.addr %s246, 8
      %s248 = scalar_lea.vmem %s0, %s247
      %p249 = pneg %p39
      %p250 = pneg %p36
      %p251 = pneg %p60
      %p252 = pneg %p57
      %p253 = pneg %p81
      %p254 = pneg %p78
      %p255 = pneg %p102
      %p256 = pneg %p99
      %p257 = pneg %p123
      %p258 = pneg %p120
      %p259 = pneg %p144
      %p260 = pneg %p141
      %p261 = pneg %p165
      %p262 = pneg %p162
      %p263 = pneg %p191
      %p264 = pneg %p188
      %s265 = smul.u32 16, %s18
      %p266 = scmp.lt.s32.totalorder %s265, 47
      %s267 = scalar_select %p266, %s265, 47
      %s268 = smul.addr %s267, 8
      %s269 = scalar_lea.vmem %s7, %s268
      %s270 = smul.u32 16, %s18
      %p271 = scmp.lt.s32.totalorder %s270, 47
      %s272 = scalar_select %p271, %s270, 47
      %s273 = smul.addr %s272, 8
      %s274 = scalar_lea.vmem %s0, %s273
      %s275 = smul.u32 16, %s18
      %s276 = smul.u32 16, %s18
      %p277 = scmp.lt.s32.totalorder %s276, 47
      %s278 = scalar_select %p277, %s276, 47
      %s279 = smul.addr %s278, 8
      %s280 = scalar_lea.vmem %s7, %s279
      %s281 = smul.u32 16, %s18
      %v283 = vld [vmem:[%s6] sm:$0xff]
      %v284 = vld [vmem:[%s6 + $0x8] sm:$0xff]
      %v285 = vld [vmem:[%s274] sm:$0xff]
      %v286 = vld [vmem:[%s274 + $0x8] sm:$0xff]
      %v287 = vld [vmem:[%s274 + $0x10] sm:$0xff]
      %v288 = vld [vmem:[%s274 + $0x18] sm:$0xff]
      %v289 = vld [vmem:[%s274 + $0x20] sm:$0xff]
      %v290 = vld [vmem:[%s274 + $0x28] sm:$0xff]
      %v291 = vld [vmem:[%s274 + $0x30] sm:$0xff]
      %v292 = vld [vmem:[%s274 + $0x38] sm:$0xff]
      %v293 = vld [vmem:[%s274 + $0x40] sm:$0xff]
      %v294 = vld [vmem:[%s274 + $0x48] sm:$0xff]
      %v295 = vld [vmem:[%s274 + $0x50] sm:$0xff]
      %v296 = vld [vmem:[%s274 + $0x58] sm:$0xff]
      %v297 = vld [vmem:[%s274 + $0x60] sm:$0xff]
      %v298 = vld [vmem:[%s274 + $0x68] sm:$0xff]
      %v299 = vld [vmem:[%s274 + $0x70] sm:$0xff]
      %v300 = vld [vmem:[%s274 + $0x78] sm:$0xff]
      %v301 = vpack.c.bf16 %v286, %v285
      %v302 = vpack.c.bf16 %v288, %v287
      %v303 = vpack.c.bf16 %v290, %v289
      %v304 = vpack.c.bf16 %v292, %v291
      %v305 = vpack.c.bf16 %v294, %v293
      %v306 = vpack.c.bf16 %v296, %v295
      %v307 = vpack.c.bf16 %v298, %v297
      %v308 = vpack.c.bf16 %v300, %v299
      %v309 = vld [vmem:[%s1] sm:$0xf]
      %v310 = vld [vmem:[%s1 + $0x4] sm:$0xf]
      %v311 = vld [vmem:[%s1 + $0x8] sm:$0xf]
      %v312 = vld [vmem:[%s1 + $0xc] sm:$0x7]
      %v317 = vunpack.c.l.b16 %v309
      %v318 = vunpack.c.l.b16 %v310
      %v319 = vunpack.c.l.b16 %v311
      %v320 = vunpack.c.l.b16 %v312
      %v321 = vpack.c.b16 %v318, %v317
      %v322 = vpack.c.b16 %v320, %v319
      %vm324 = vcmask 244736
      %v326 = vsel %vm324, %v301, 0
      %v329 = vsel %vm324, %v302, 0
      %v332 = vsel %vm324, %v303, 0
      %v335 = vsel %vm324, %v304, 0
      %v338 = vsel %vm324, %v305, 0
      %v341 = vsel %vm324, %v306, 0
      %v344 = vsel %vm324, %v307, 0
      %v347 = vsel %vm324, %v308, 0
      %vm349 = vcmask 1046528
      %v351 = vsel %vm349, %v322, 0
      %353 = vmatpush.bf16.msra.mxu0 0
      %354 = vmatpush.bf16.msra.mxu0 0
      %355 = vmatpush.bf16.msra.mxu0 0
      %356 = vmatpush.bf16.msra.mxu0 0
      %357 = vmatpush.bf16.msra.mxu0 0
      %358 = vmatpush.bf16.msra.mxu0 0
      %359 = vmatpush.bf16.msra.mxu0 %v351
      %360 = vmatpush.bf16.msra.mxu0 %v321
      %361 = vmatmul.bf16.gmra.mxu0 %v326
      %v362 = vpop.f32.mrf.mxu0
      %v363 = vadd.f32 0.0, %v362
      %v364 = vpop.f32.mrf.mxu0
      %v365 = vadd.f32 0.0, %v364
      %366 = vmatmul.bf16.gmra.mxu0 %v329
      %v367 = vpop.f32.mrf.mxu0
      %v368 = vadd.f32 0.0, %v367
      %v369 = vpop.f32.mrf.mxu0
      %v370 = vadd.f32 0.0, %v369
      %371 = vmatmul.bf16.gmra.mxu0 %v332
      %v372 = vpop.f32.mrf.mxu0
      %v373 = vadd.f32 0.0, %v372
      %v374 = vpop.f32.mrf.mxu0
      %v375 = vadd.f32 0.0, %v374
      %376 = vmatmul.bf16.gmra.mxu0 %v335
      %v377 = vpop.f32.mrf.mxu0
      %v378 = vadd.f32 0.0, %v377
      %v379 = vpop.f32.mrf.mxu0
      %v380 = vadd.f32 0.0, %v379
      %381 = vmatmul.bf16.gmra.mxu0 %v338
      %v382 = vpop.f32.mrf.mxu0
      %v383 = vadd.f32 0.0, %v382
      %v384 = vpop.f32.mrf.mxu0
      %v385 = vadd.f32 0.0, %v384
      %386 = vmatmul.bf16.gmra.mxu0 %v341
      %v387 = vpop.f32.mrf.mxu0
      %v388 = vadd.f32 0.0, %v387
      %v389 = vpop.f32.mrf.mxu0
      %v390 = vadd.f32 0.0, %v389
      %391 = vmatmul.bf16.gmra.mxu0 %v344
      %v392 = vpop.f32.mrf.mxu0
      %v393 = vadd.f32 0.0, %v392
      %v394 = vpop.f32.mrf.mxu0
      %v395 = vadd.f32 0.0, %v394
      %396 = vmatmul.bf16.gmra.mxu0 %v347
      %v397 = vpop.f32.mrf.mxu0
      %v398 = vadd.f32 0.0, %v397
      %v399 = vpop.f32.mrf.mxu0
      %v400 = vadd.f32 0.0, %v399
      %401 = vdwg.mxu0
      %v402 = vperm.slane %v283, 0
      %v403 = vmul.f32 %v363, %v402
      %v404 = vmul.f32 %v365, %v402
      %v405 = vmul.f32 %v368, %v402
      %v406 = vmul.f32 %v370, %v402
      %v407 = vmul.f32 %v373, %v402
      %v408 = vmul.f32 %v375, %v402
      %v409 = vmul.f32 %v378, %v402
      %v410 = vmul.f32 %v380, %v402
      %v411 = vmul.f32 %v383, %v402
      %v412 = vmul.f32 %v385, %v402
      %v413 = vmul.f32 %v388, %v402
      %v414 = vmul.f32 %v390, %v402
      %v415 = vmul.f32 %v393, %v402
      %v416 = vmul.f32 %v395, %v402
      %v417 = vmul.f32 %v398, %v402
      %v418 = vmul.f32 %v400, %v402
      %v419 = vperm.slane %v283, 4
      %v420 = vadd.f32 %v403, %v419
      %v421 = vadd.f32 %v404, %v419
      %v422 = vadd.f32 %v405, %v419
      %v423 = vadd.f32 %v406, %v419
      %v424 = vadd.f32 %v407, %v419
      %v425 = vadd.f32 %v408, %v419
      %v426 = vadd.f32 %v409, %v419
      %v427 = vadd.f32 %v410, %v419
      %v428 = vadd.f32 %v411, %v419
      %v429 = vadd.f32 %v412, %v419
      %v430 = vadd.f32 %v413, %v419
      %v431 = vadd.f32 %v414, %v419
      %v432 = vadd.f32 %v415, %v419
      %v433 = vadd.f32 %v416, %v419
      %v434 = vadd.f32 %v417, %v419
      %v435 = vadd.f32 %v418, %v419
      %v436 = vmax.f32 %v420, 0.0
      %v437 = vmax.f32 %v421, 0.0
      %v438 = vmax.f32 %v422, 0.0
      %v439 = vmax.f32 %v423, 0.0
      %v440 = vmax.f32 %v424, 0.0
      %v441 = vmax.f32 %v425, 0.0
      %v442 = vmax.f32 %v426, 0.0
      %v443 = vmax.f32 %v427, 0.0
      %v444 = vmax.f32 %v428, 0.0
      %v445 = vmax.f32 %v429, 0.0
      %v446 = vmax.f32 %v430, 0.0
      %v447 = vmax.f32 %v431, 0.0
      %v448 = vmax.f32 %v432, 0.0
      %v449 = vmax.f32 %v433, 0.0
      %v450 = vmax.f32 %v434, 0.0
      %v451 = vmax.f32 %v435, 0.0
      %v452 = vpack.c.bf16 %v437, %v436
      %v453 = vpack.c.bf16 %v439, %v438
      %v454 = vpack.c.bf16 %v441, %v440
      %v455 = vpack.c.bf16 %v443, %v442
      %v456 = vpack.c.bf16 %v445, %v444
      %v457 = vpack.c.bf16 %v447, %v446
      %v458 = vpack.c.bf16 %v449, %v448
      %v459 = vpack.c.bf16 %v451, %v450
      %v460 = vld [vmem:[%s2] sm:$0xf]
      %v461 = vld [vmem:[%s2 + $0x4] sm:$0xf]
      %v462 = vld [vmem:[%s2 + $0x8] sm:$0xf]
      %v463 = vld [vmem:[%s2 + $0xc] sm:$0xf]
      %v464 = vld [vmem:[%s2 + $0x10] sm:$0xf]
      %v465 = vld [vmem:[%s2 + $0x14] sm:$0xf]
      %v466 = vld [vmem:[%s2 + $0x18] sm:$0xf]
      %v467 = vld [vmem:[%s2 + $0x1c] sm:$0xf]
      %v468 = vld [vmem:[%s2 + $0x20] sm:$0xf]
      %v469 = vld [vmem:[%s2 + $0x24] sm:$0xf]
      %v470 = vld [vmem:[%s2 + $0x28] sm:$0xf]
      %v471 = vld [vmem:[%s2 + $0x2c] sm:$0xf]
      %v472 = vld [vmem:[%s2 + $0x30] sm:$0xf]
      %v473 = vld [vmem:[%s2 + $0x34] sm:$0xf]
      %v474 = vld [vmem:[%s2 + $0x38] sm:$0xf]
      %v475 = vld [vmem:[%s2 + $0x3c] sm:$0xf]
      %v492 = vunpack.c.l.b16 %v460
      %v493 = vunpack.c.l.b16 %v461
      %v494 = vunpack.c.l.b16 %v462
      %v495 = vunpack.c.l.b16 %v463
      %v496 = vunpack.c.l.b16 %v464
      %v497 = vunpack.c.l.b16 %v465
      %v498 = vunpack.c.l.b16 %v466
      %v499 = vunpack.c.l.b16 %v467
      %v500 = vunpack.c.l.b16 %v468
      %v501 = vunpack.c.l.b16 %v469
      %v502 = vunpack.c.l.b16 %v470
      %v503 = vunpack.c.l.b16 %v471
      %v504 = vunpack.c.l.b16 %v472
      %v505 = vunpack.c.l.b16 %v473
      %v506 = vunpack.c.l.b16 %v474
      %v507 = vunpack.c.l.b16 %v475
      %v508 = vpack.c.b16 %v493, %v492
      %v509 = vpack.c.b16 %v495, %v494
      %v510 = vpack.c.b16 %v497, %v496
      %v511 = vpack.c.b16 %v499, %v498
      %v512 = vpack.c.b16 %v501, %v500
      %v513 = vpack.c.b16 %v503, %v502
      %v514 = vpack.c.b16 %v505, %v504
      %v515 = vpack.c.b16 %v507, %v506
      %524 = vmatpush.bf16.msra.mxu0 %v515
      %525 = vmatpush.bf16.msra.mxu0 %v514
      %526 = vmatpush.bf16.msra.mxu0 %v513
      %527 = vmatpush.bf16.msra.mxu0 %v512
      %528 = vmatpush.bf16.msra.mxu0 %v511
      %529 = vmatpush.bf16.msra.mxu0 %v510
      %530 = vmatpush.bf16.msra.mxu0 %v509
      %531 = vmatpush.bf16.msra.mxu0 %v508
      %532 = vmatmul.bf16.gmra.mxu0 %v452
      %v533 = vpop.f32.mrf.mxu0
      %v534 = vadd.f32 0.0, %v533
      %v535 = vpop.f32.mrf.mxu0
      %v536 = vadd.f32 0.0, %v535
      %537 = vmatmul.bf16.gmra.mxu0 %v453
      %v538 = vpop.f32.mrf.mxu0
      %v539 = vadd.f32 0.0, %v538
      %v540 = vpop.f32.mrf.mxu0
      %v541 = vadd.f32 0.0, %v540
      %542 = vmatmul.bf16.gmra.mxu0 %v454
      %v543 = vpop.f32.mrf.mxu0
      %v544 = vadd.f32 0.0, %v543
      %v545 = vpop.f32.mrf.mxu0
      %v546 = vadd.f32 0.0, %v545
      %547 = vmatmul.bf16.gmra.mxu0 %v455
      %v548 = vpop.f32.mrf.mxu0
      %v549 = vadd.f32 0.0, %v548
      %v550 = vpop.f32.mrf.mxu0
      %v551 = vadd.f32 0.0, %v550
      %552 = vmatmul.bf16.gmra.mxu0 %v456
      %v553 = vpop.f32.mrf.mxu0
      %v554 = vadd.f32 0.0, %v553
      %v555 = vpop.f32.mrf.mxu0
      %v556 = vadd.f32 0.0, %v555
      %557 = vmatmul.bf16.gmra.mxu0 %v457
      %v558 = vpop.f32.mrf.mxu0
      %v559 = vadd.f32 0.0, %v558
      %v560 = vpop.f32.mrf.mxu0
      %v561 = vadd.f32 0.0, %v560
      %562 = vmatmul.bf16.gmra.mxu0 %v458
      %v563 = vpop.f32.mrf.mxu0
      %v564 = vadd.f32 0.0, %v563
      %v565 = vpop.f32.mrf.mxu0
      %v566 = vadd.f32 0.0, %v565
      %567 = vmatmul.bf16.gmra.mxu0 %v459
      %v568 = vpop.f32.mrf.mxu0
      %v569 = vadd.f32 0.0, %v568
      %v570 = vpop.f32.mrf.mxu0
      %v571 = vadd.f32 0.0, %v570
      %572 = vdwg.mxu0
      %v573 = vperm.slane %v283, 1
      %v574 = vmul.f32 %v534, %v573
      %v575 = vmul.f32 %v536, %v573
      %v576 = vmul.f32 %v539, %v573
      %v577 = vmul.f32 %v541, %v573
      %v578 = vmul.f32 %v544, %v573
      %v579 = vmul.f32 %v546, %v573
      %v580 = vmul.f32 %v549, %v573
      %v581 = vmul.f32 %v551, %v573
      %v582 = vmul.f32 %v554, %v573
      %v583 = vmul.f32 %v556, %v573
      %v584 = vmul.f32 %v559, %v573
      %v585 = vmul.f32 %v561, %v573
      %v586 = vmul.f32 %v564, %v573
      %v587 = vmul.f32 %v566, %v573
      %v588 = vmul.f32 %v569, %v573
      %v589 = vmul.f32 %v571, %v573
      %v590 = vperm.slane %v283, 5
      %v591 = vadd.f32 %v574, %v590
      %v592 = vadd.f32 %v575, %v590
      %v593 = vadd.f32 %v576, %v590
      %v594 = vadd.f32 %v577, %v590
      %v595 = vadd.f32 %v578, %v590
      %v596 = vadd.f32 %v579, %v590
      %v597 = vadd.f32 %v580, %v590
      %v598 = vadd.f32 %v581, %v590
      %v599 = vadd.f32 %v582, %v590
      %v600 = vadd.f32 %v583, %v590
      %v601 = vadd.f32 %v584, %v590
      %v602 = vadd.f32 %v585, %v590
      %v603 = vadd.f32 %v586, %v590
      %v604 = vadd.f32 %v587, %v590
      %v605 = vadd.f32 %v588, %v590
      %v606 = vadd.f32 %v589, %v590
      %v607 = vmax.f32 %v591, 0.0
      %v608 = vmax.f32 %v592, 0.0
      %v609 = vmax.f32 %v593, 0.0
      %v610 = vmax.f32 %v594, 0.0
      %v611 = vmax.f32 %v595, 0.0
      %v612 = vmax.f32 %v596, 0.0
      %v613 = vmax.f32 %v597, 0.0
      %v614 = vmax.f32 %v598, 0.0
      %v615 = vmax.f32 %v599, 0.0
      %v616 = vmax.f32 %v600, 0.0
      %v617 = vmax.f32 %v601, 0.0
      %v618 = vmax.f32 %v602, 0.0
      %v619 = vmax.f32 %v603, 0.0
      %v620 = vmax.f32 %v604, 0.0
      %v621 = vmax.f32 %v605, 0.0
      %v622 = vmax.f32 %v606, 0.0
      %v623 = vpack.c.bf16 %v608, %v607
      %v624 = vpack.c.bf16 %v610, %v609
      %v625 = vpack.c.bf16 %v612, %v611
      %v626 = vpack.c.bf16 %v614, %v613
      %v627 = vpack.c.bf16 %v616, %v615
      %v628 = vpack.c.bf16 %v618, %v617
      %v629 = vpack.c.bf16 %v620, %v619
      %v630 = vpack.c.bf16 %v622, %v621
      %v631 = vld [vmem:[%s3] sm:$0xf]
      %v632 = vld [vmem:[%s3 + $0x4] sm:$0xf]
      %v633 = vld [vmem:[%s3 + $0x8] sm:$0xf]
      %v634 = vld [vmem:[%s3 + $0xc] sm:$0xf]
      %v635 = vld [vmem:[%s3 + $0x10] sm:$0xf]
      %v636 = vld [vmem:[%s3 + $0x14] sm:$0xf]
      %v637 = vld [vmem:[%s3 + $0x18] sm:$0xf]
      %v638 = vld [vmem:[%s3 + $0x1c] sm:$0xf]
      %v647 = vunpack.c.l.b16 %v631
      %v648 = vunpack.c.l.b16 %v632
      %v649 = vunpack.c.l.b16 %v633
      %v650 = vunpack.c.l.b16 %v634
      %v651 = vunpack.c.l.b16 %v635
      %v652 = vunpack.c.l.b16 %v636
      %v653 = vunpack.c.l.b16 %v637
      %v654 = vunpack.c.l.b16 %v638
      %v655 = vpack.c.b16 %v648, %v647
      %v656 = vpack.c.b16 %v650, %v649
      %v657 = vpack.c.b16 %v652, %v651
      %v658 = vpack.c.b16 %v654, %v653
      %vm663 = vcmask 523264
      %v665 = vsel %vm663, %v623, 0
      %v668 = vsel %vm663, %v624, 0
      %v671 = vsel %vm663, %v625, 0
      %v674 = vsel %vm663, %v626, 0
      %v677 = vsel %vm663, %v627, 0
      %v680 = vsel %vm663, %v628, 0
      %v683 = vsel %vm663, %v629, 0
      %v686 = vsel %vm663, %v630, 0
      %688 = vmatpush.bf16.msra.mxu0 0
      %689 = vmatpush.bf16.msra.mxu0 0
      %690 = vmatpush.bf16.msra.mxu0 0
      %691 = vmatpush.bf16.msra.mxu0 0
      %692 = vmatpush.bf16.msra.mxu0 %v658
      %693 = vmatpush.bf16.msra.mxu0 %v657
      %694 = vmatpush.bf16.msra.mxu0 %v656
      %695 = vmatpush.bf16.msra.mxu0 %v655
      %696 = vmatmul.bf16.gmra.mxu0 %v665
      %v697 = vpop.f32.mrf.mxu0
      %v698 = vadd.f32 0.0, %v697
      %v699 = vpop.f32.mrf.mxu0
      %v700 = vadd.f32 0.0, %v699
      %701 = vmatmul.bf16.gmra.mxu0 %v668
      %v702 = vpop.f32.mrf.mxu0
      %v703 = vadd.f32 0.0, %v702
      %v704 = vpop.f32.mrf.mxu0
      %v705 = vadd.f32 0.0, %v704
      %706 = vmatmul.bf16.gmra.mxu0 %v671
      %v707 = vpop.f32.mrf.mxu0
      %v708 = vadd.f32 0.0, %v707
      %v709 = vpop.f32.mrf.mxu0
      %v710 = vadd.f32 0.0, %v709
      %711 = vmatmul.bf16.gmra.mxu0 %v674
      %v712 = vpop.f32.mrf.mxu0
      %v713 = vadd.f32 0.0, %v712
      %v714 = vpop.f32.mrf.mxu0
      %v715 = vadd.f32 0.0, %v714
      %716 = vmatmul.bf16.gmra.mxu0 %v677
      %v717 = vpop.f32.mrf.mxu0
      %v718 = vadd.f32 0.0, %v717
      %v719 = vpop.f32.mrf.mxu0
      %v720 = vadd.f32 0.0, %v719
      %721 = vmatmul.bf16.gmra.mxu0 %v680
      %v722 = vpop.f32.mrf.mxu0
      %v723 = vadd.f32 0.0, %v722
      %v724 = vpop.f32.mrf.mxu0
      %v725 = vadd.f32 0.0, %v724
      %726 = vmatmul.bf16.gmra.mxu0 %v683
      %v727 = vpop.f32.mrf.mxu0
      %v728 = vadd.f32 0.0, %v727
      %v729 = vpop.f32.mrf.mxu0
      %v730 = vadd.f32 0.0, %v729
      %731 = vmatmul.bf16.gmra.mxu0 %v686
      %v732 = vpop.f32.mrf.mxu0
      %v733 = vadd.f32 0.0, %v732
      %v734 = vpop.f32.mrf.mxu0
      %v735 = vadd.f32 0.0, %v734
      %736 = vdwg.mxu0
      %v737 = vperm.slane %v283, 2
      %v738 = vmul.f32 %v698, %v737
      %v739 = vmul.f32 %v700, %v737
      %v740 = vmul.f32 %v703, %v737
      %v741 = vmul.f32 %v705, %v737
      %v742 = vmul.f32 %v708, %v737
      %v743 = vmul.f32 %v710, %v737
      %v744 = vmul.f32 %v713, %v737
      %v745 = vmul.f32 %v715, %v737
      %v746 = vmul.f32 %v718, %v737
      %v747 = vmul.f32 %v720, %v737
      %v748 = vmul.f32 %v723, %v737
      %v749 = vmul.f32 %v725, %v737
      %v750 = vmul.f32 %v728, %v737
      %v751 = vmul.f32 %v730, %v737
      %v752 = vmul.f32 %v733, %v737
      %v753 = vmul.f32 %v735, %v737
      %v754 = vperm.slane %v283, 6
      %v755 = vadd.f32 %v738, %v754
      %v756 = vadd.f32 %v739, %v754
      %v757 = vadd.f32 %v740, %v754
      %v758 = vadd.f32 %v741, %v754
      %v759 = vadd.f32 %v742, %v754
      %v760 = vadd.f32 %v743, %v754
      %v761 = vadd.f32 %v744, %v754
      %v762 = vadd.f32 %v745, %v754
      %v763 = vadd.f32 %v746, %v754
      %v764 = vadd.f32 %v747, %v754
      %v765 = vadd.f32 %v748, %v754
      %v766 = vadd.f32 %v749, %v754
      %v767 = vadd.f32 %v750, %v754
      %v768 = vadd.f32 %v751, %v754
      %v769 = vadd.f32 %v752, %v754
      %v770 = vadd.f32 %v753, %v754
      %v771 = vmax.f32 %v755, 0.0
      %v772 = vmax.f32 %v756, 0.0
      %v773 = vmax.f32 %v757, 0.0
      %v774 = vmax.f32 %v758, 0.0
      %v775 = vmax.f32 %v759, 0.0
      %v776 = vmax.f32 %v760, 0.0
      %v777 = vmax.f32 %v761, 0.0
      %v778 = vmax.f32 %v762, 0.0
      %v779 = vmax.f32 %v763, 0.0
      %v780 = vmax.f32 %v764, 0.0
      %v781 = vmax.f32 %v765, 0.0
      %v782 = vmax.f32 %v766, 0.0
      %v783 = vmax.f32 %v767, 0.0
      %v784 = vmax.f32 %v768, 0.0
      %v785 = vmax.f32 %v769, 0.0
      %v786 = vmax.f32 %v770, 0.0
      %v787 = vpack.c.bf16 %v772, %v771
      %v788 = vpack.c.bf16 %v774, %v773
      %v789 = vpack.c.bf16 %v776, %v775
      %v790 = vpack.c.bf16 %v778, %v777
      %v791 = vpack.c.bf16 %v780, %v779
      %v792 = vpack.c.bf16 %v782, %v781
      %v793 = vpack.c.bf16 %v784, %v783
      %v794 = vpack.c.bf16 %v786, %v785
      %v795 = vld [vmem:[%s4] sm:$0xf]
      %v796 = vld [vmem:[%s4 + $0x4] sm:$0xf]
      %v797 = vld [vmem:[%s4 + $0x8] sm:$0xf]
      %v798 = vld [vmem:[%s4 + $0xc] sm:$0xf]
      %v803 = vunpack.c.l.b16 %v795
      %v804 = vunpack.c.l.b16 %v796
      %v805 = vunpack.c.l.b16 %v797
      %v806 = vunpack.c.l.b16 %v798
      %v807 = vpack.c.b16 %v804, %v803
      %v808 = vpack.c.b16 %v806, %v805
      %vm811 = vcmask 261120
      %v813 = vsel %vm811, %v787, 0
      %v816 = vsel %vm811, %v788, 0
      %v819 = vsel %vm811, %v789, 0
      %v822 = vsel %vm811, %v790, 0
      %v825 = vsel %vm811, %v791, 0
      %v828 = vsel %vm811, %v792, 0
      %v831 = vsel %vm811, %v793, 0
      %v834 = vsel %vm811, %v794, 0
      %836 = vmatpush.bf16.msra.mxu0 0
      %837 = vmatpush.bf16.msra.mxu0 0
      %838 = vmatpush.bf16.msra.mxu0 0
      %839 = vmatpush.bf16.msra.mxu0 0
      %840 = vmatpush.bf16.msra.mxu0 0
      %841 = vmatpush.bf16.msra.mxu0 0
      %842 = vmatpush.bf16.msra.mxu0 %v808
      %843 = vmatpush.bf16.msra.mxu0 %v807
      %844 = vmatmul.bf16.gmra.mxu0 %v813
      %v845 = vpop.f32.mrf.mxu0
      %v846 = vadd.f32 0.0, %v845
      %v847 = vpop.f32.mrf.mxu0
      %v848 = vadd.f32 0.0, %v847
      %849 = vmatmul.bf16.gmra.mxu0 %v816
      %v850 = vpop.f32.mrf.mxu0
      %v851 = vadd.f32 0.0, %v850
      %v852 = vpop.f32.mrf.mxu0
      %v853 = vadd.f32 0.0, %v852
      %854 = vmatmul.bf16.gmra.mxu0 %v819
      %v855 = vpop.f32.mrf.mxu0
      %v856 = vadd.f32 0.0, %v855
      %v857 = vpop.f32.mrf.mxu0
      %v858 = vadd.f32 0.0, %v857
      %859 = vmatmul.bf16.gmra.mxu0 %v822
      %v860 = vpop.f32.mrf.mxu0
      %v861 = vadd.f32 0.0, %v860
      %v862 = vpop.f32.mrf.mxu0
      %v863 = vadd.f32 0.0, %v862
      %864 = vmatmul.bf16.gmra.mxu0 %v825
      %v865 = vpop.f32.mrf.mxu0
      %v866 = vadd.f32 0.0, %v865
      %v867 = vpop.f32.mrf.mxu0
      %v868 = vadd.f32 0.0, %v867
      %869 = vmatmul.bf16.gmra.mxu0 %v828
      %v870 = vpop.f32.mrf.mxu0
      %v871 = vadd.f32 0.0, %v870
      %v872 = vpop.f32.mrf.mxu0
      %v873 = vadd.f32 0.0, %v872
      %874 = vmatmul.bf16.gmra.mxu0 %v831
      %v875 = vpop.f32.mrf.mxu0
      %v876 = vadd.f32 0.0, %v875
      %v877 = vpop.f32.mrf.mxu0
      %v878 = vadd.f32 0.0, %v877
      %879 = vmatmul.bf16.gmra.mxu0 %v834
      %v880 = vpop.f32.mrf.mxu0
      %v881 = vadd.f32 0.0, %v880
      %v882 = vpop.f32.mrf.mxu0
      %v883 = vadd.f32 0.0, %v882
      %884 = vdwg.mxu0
      %v885 = vperm.slane %v283, 3
      %v886 = vmul.f32 %v846, %v885
      %v887 = vmul.f32 %v848, %v885
      %v888 = vmul.f32 %v851, %v885
      %v889 = vmul.f32 %v853, %v885
      %v890 = vmul.f32 %v856, %v885
      %v891 = vmul.f32 %v858, %v885
      %v892 = vmul.f32 %v861, %v885
      %v893 = vmul.f32 %v863, %v885
      %v894 = vmul.f32 %v866, %v885
      %v895 = vmul.f32 %v868, %v885
      %v896 = vmul.f32 %v871, %v885
      %v897 = vmul.f32 %v873, %v885
      %v898 = vmul.f32 %v876, %v885
      %v899 = vmul.f32 %v878, %v885
      %v900 = vmul.f32 %v881, %v885
      %v901 = vmul.f32 %v883, %v885
      %v902 = vperm.slane %v283, 7
      %v903 = vadd.f32 %v886, %v902
      %v904 = vadd.f32 %v887, %v902
      %v905 = vadd.f32 %v888, %v902
      %v906 = vadd.f32 %v889, %v902
      %v907 = vadd.f32 %v890, %v902
      %v908 = vadd.f32 %v891, %v902
      %v909 = vadd.f32 %v892, %v902
      %v910 = vadd.f32 %v893, %v902
      %v911 = vadd.f32 %v894, %v902
      %v912 = vadd.f32 %v895, %v902
      %v913 = vadd.f32 %v896, %v902
      %v914 = vadd.f32 %v897, %v902
      %v915 = vadd.f32 %v898, %v902
      %v916 = vadd.f32 %v899, %v902
      %v917 = vadd.f32 %v900, %v902
      %v918 = vadd.f32 %v901, %v902
      %v919 = vmax.f32 %v903, 0.0
      %v920 = vmax.f32 %v904, 0.0
      %v921 = vmax.f32 %v905, 0.0
      %v922 = vmax.f32 %v906, 0.0
      %v923 = vmax.f32 %v907, 0.0
      %v924 = vmax.f32 %v908, 0.0
      %v925 = vmax.f32 %v909, 0.0
      %v926 = vmax.f32 %v910, 0.0
      %v927 = vmax.f32 %v911, 0.0
      %v928 = vmax.f32 %v912, 0.0
      %v929 = vmax.f32 %v913, 0.0
      %v930 = vmax.f32 %v914, 0.0
      %v931 = vmax.f32 %v915, 0.0
      %v932 = vmax.f32 %v916, 0.0
      %v933 = vmax.f32 %v917, 0.0
      %v934 = vmax.f32 %v918, 0.0
      %v935 = vpack.c.bf16 %v920, %v919
      %v936 = vpack.c.bf16 %v922, %v921
      %v937 = vpack.c.bf16 %v924, %v923
      %v938 = vpack.c.bf16 %v926, %v925
      %v939 = vpack.c.bf16 %v928, %v927
      %v940 = vpack.c.bf16 %v930, %v929
      %v941 = vpack.c.bf16 %v932, %v931
      %v942 = vpack.c.bf16 %v934, %v933
      %v943 = vld [vmem:[%s5] sm:$0xf]
      %v944 = vld [vmem:[%s5 + $0x4] sm:$0xf]
      %v945 = vperm.slane %v284, 0
      %v948 = vunpack.c.l.b16 %v943
      %v949 = vunpack.c.l.b16 %v944
      %v950 = vpack.c.b16 %v949, %v948
      %vm952 = vcmask 130048
      %v954 = vsel %vm952, %v935, 0
      %v957 = vsel %vm952, %v936, 0
      %v960 = vsel %vm952, %v937, 0
      %v963 = vsel %vm952, %v938, 0
      %v966 = vsel %vm952, %v939, 0
      %v969 = vsel %vm952, %v940, 0
      %v972 = vsel %vm952, %v941, 0
      %v975 = vsel %vm952, %v942, 0
      %977 = vmatpush.bf16.msra.mxu0 0
      %978 = vmatpush.bf16.msra.mxu0 0
      %979 = vmatpush.bf16.msra.mxu0 0
      %980 = vmatpush.bf16.msra.mxu0 0
      %981 = vmatpush.bf16.msra.mxu0 0
      %982 = vmatpush.bf16.msra.mxu0 0
      %983 = vmatpush.bf16.msra.mxu0 0
      %984 = vmatpush.bf16.msra.mxu0 %v950
      %985 = vmatmul.bf16.gmra.mxu0 %v954
      %v986 = vpop.f32.mrf.mxu0
      %v987 = vadd.f32 %v945, %v986
      %v988 = vpop.f32.mrf.mxu0
      %v989 = vadd.f32 %v945, %v988
      %990 = vmatmul.bf16.gmra.mxu0 %v957
      %v991 = vpop.f32.mrf.mxu0
      %v992 = vadd.f32 %v945, %v991
      %v993 = vpop.f32.mrf.mxu0
      %v994 = vadd.f32 %v945, %v993
      %995 = vmatmul.bf16.gmra.mxu0 %v960
      %v996 = vpop.f32.mrf.mxu0
      %v997 = vadd.f32 %v945, %v996
      %v998 = vpop.f32.mrf.mxu0
      %v999 = vadd.f32 %v945, %v998
      %1000 = vmatmul.bf16.gmra.mxu0 %v963
      %v1001 = vpop.f32.mrf.mxu0
      %v1002 = vadd.f32 %v945, %v1001
      %v1003 = vpop.f32.mrf.mxu0
      %v1004 = vadd.f32 %v945, %v1003
      %1005 = vmatmul.bf16.gmra.mxu0 %v966
      %v1006 = vpop.f32.mrf.mxu0
      %v1007 = vadd.f32 %v945, %v1006
      %v1008 = vpop.f32.mrf.mxu0
      %v1009 = vadd.f32 %v945, %v1008
      %1010 = vmatmul.bf16.gmra.mxu0 %v969
      %v1011 = vpop.f32.mrf.mxu0
      %v1012 = vadd.f32 %v945, %v1011
      %v1013 = vpop.f32.mrf.mxu0
      %v1014 = vadd.f32 %v945, %v1013
      %1015 = vmatmul.bf16.gmra.mxu0 %v972
      %v1016 = vpop.f32.mrf.mxu0
      %v1017 = vadd.f32 %v945, %v1016
      %v1018 = vpop.f32.mrf.mxu0
      %v1019 = vadd.f32 %v945, %v1018
      %1020 = vmatmul.bf16.gmra.mxu0 %v975
      %v1021 = vpop.f32.mrf.mxu0
      %v1022 = vadd.f32 %v945, %v1021
      %v1023 = vpop.f32.mrf.mxu0
      %v1024 = vadd.f32 %v945, %v1023
      %1025 = vdwg.mxu0
      %vm1026 = vcmask 64512
      %1027 = vst.msk [vmem:[%s280] sm:$0xff] %vm1026, %v987
      %1028 = vst.msk [vmem:[%s280 + $0x8] sm:$0xff] %vm1026, %v989
      %1029 = vst.msk [vmem:[%s280 + $0x10] sm:$0xff] %vm1026, %v992
      %1030 = vst.msk [vmem:[%s280 + $0x18] sm:$0xff] %vm1026, %v994
      %1031 = vst.msk [vmem:[%s280 + $0x20] sm:$0xff] %vm1026, %v997
      %1032 = vst.msk [vmem:[%s280 + $0x28] sm:$0xff] %vm1026, %v999
      %1033 = vst.msk [vmem:[%s280 + $0x30] sm:$0xff] %vm1026, %v1002
      %1034 = vst.msk [vmem:[%s280 + $0x38] sm:$0xff] %vm1026, %v1004
      %1035 = vst.msk [vmem:[%s280 + $0x40] sm:$0xff] %vm1026, %v1007
      %1036 = vst.msk [vmem:[%s280 + $0x48] sm:$0xff] %vm1026, %v1009
      %1037 = vst.msk [vmem:[%s280 + $0x50] sm:$0xff] %vm1026, %v1012
      %1038 = vst.msk [vmem:[%s280 + $0x58] sm:$0xff] %vm1026, %v1014
      %1039 = vst.msk [vmem:[%s280 + $0x60] sm:$0xff] %vm1026, %v1017
      %1040 = vst.msk [vmem:[%s280 + $0x68] sm:$0xff] %vm1026, %v1019
      %1041 = vst.msk [vmem:[%s280 + $0x70] sm:$0xff] %vm1026, %v1022
      %1042 = vst.msk [vmem:[%s280 + $0x78] sm:$0xff] %vm1026, %v1024
      %s1043 = smul.u32 16, %s18
      %p1044 = scmp.lt.s32.totalorder %s1043, 47
      %s1045 = scalar_select %p1044, %s1043, 47
      %s1046 = smul.addr %s1045, 8
      %s1047 = scalar_lea.vmem %s7, %s1046
      // Predicated region
      $region49: #{tpu_custom_call.1} parent=47 // pred_check
        %p1048 = pneg %p188
      $region50: #{tpu_custom_call.1} parent=47 // pred_check_branch
        %1050 = sbr.rel (%p1048) target = $region52
      $region51: #{tpu_custom_call.1} parent=47 // pred_region
        %s1051 = smul.u32 16, %s18
      $region52: #{tpu_custom_call.1} parent=47 // pred_fallthru
        _
    $region48: #{tpu_custom_call.1} parent=5 // pred_fallthru
      _
    %p1052 = scmp.le.s32.totalorder 2, %s13
    // Predicated region
    $region53: #{tpu_custom_call.1} parent=5 // pred_check
      %p1053 = pneg %p1052
    $region54: #{tpu_custom_call.1} parent=5 // pred_check_branch
      %1055 = sbr.rel (%p1053) target = $region56
    $region55: #{tpu_custom_call.1} parent=5 // pred_region
      %s1056 = ssub.s32 %s13, 2
      // Predicated region
      $region57: #{tpu_custom_call.1} parent=55 // pred_check
        %p1057 = pneg %p194
      $region58: #{tpu_custom_call.1} parent=55 // pred_check_branch
        %1059 = sbr.rel (%p1057) target = $region60
      $region59: #{tpu_custom_call.1} parent=55 // pred_region
        %s1060 = smul.u32 16, %s19
        %p1061 = scmp.lt.s32.totalorder %s1060, 47
        %s1062 = scalar_select %p1061, %s1060, 47
        %s1063 = smul.addr %s1062, 8
        %s1064 = scalar_lea.vmem %s7, %s1063
      $region60: #{tpu_custom_call.1} parent=55 // pred_fallthru
        _
    $region56: #{tpu_custom_call.1} parent=5 // pred_fallthru
      _
  $region6: #{tpu_custom_call.1} parent=0 // loop_footer
    %s17 = sadd.s32 1, %s13
  $region7: #{tpu_custom_call.1} parent=0 // loop_footer_branch
    %12 = sbr.rel target = $region3
  $region8: #{tpu_custom_call.1} parent=0 // loop_exit
    _

</llo_original>
